<compile_context>
chip_gen: v5e
topology: v5e:2x2
jax: 0.10.0
libtpu: 0.0.40
codegen_flags: <defaults>
</compile_context>

<pallas_src>
import functools

import jax
import jax.numpy as jnp
from jax.experimental import pallas as pl
from jax.experimental.pallas import tpu as pltpu

WINDOW_SIZE = 512
# Original 6 Linear layers: 512 -> 256 -> 64 -> 16 -> 64 -> 256 -> 512
DIMS = [WINDOW_SIZE, 256, 64, 16, 64, 256, WINDOW_SIZE]
# ReLU after layers 0, 1, 3, 4 (not after the bottleneck projection 64->16 and
# not after the final reconstruction) — matches the PyTorch Sequential.
RELU_AFTER = (True, True, False, True, True, False)

# After fusing the ReLU-free bottleneck pair (layers 2 & 3) into one 64->64:
FUSED_DIMS = [WINDOW_SIZE, 256, 64, 64, 256, WINDOW_SIZE]
FUSED_RELU = (True, True, True, True, False)
NUM_FUSED_LAYERS = 5


def _autoencoder_kernel(x_ref, *refs):
    """refs = (w1,b1, ..., w5,b5, out_ref).

    Weights are bf16 (in, out); biases are f32 (1, out); x/out are f32.
    """
    out_ref = refs[-1]
    param_refs = refs[:-1]

    h = x_ref[...]  # f32 (tile, 512)
    for layer in range(NUM_FUSED_LAYERS):
        w = param_refs[2 * layer][...]        # bf16 (in, out)
        b = param_refs[2 * layer + 1][...]    # f32 (1, out), broadcasts over rows
        # bf16 x bf16 MXU matmul with f32 accumulation.
        h = jnp.dot(h.astype(jnp.bfloat16), w,
                    preferred_element_type=jnp.float32) + b
        if FUSED_RELU[layer]:
            h = jnp.maximum(h, 0.0)
    out_ref[...] = h.astype(out_ref.dtype)


def _round_up(n, m):
    return ((n + m - 1) // m) * m


@functools.partial(jax.jit, static_argnames=("batch_tile",))
def autoencoder_forward(x, kernel_params, batch_tile=256):
    """x: (B, 512) f32.  kernel_params: 5 x (W bf16 (in,out), b f32 (1,out)).

    batch_tile: sweep 128/256/512 on real workloads; keep a multiple of 8.
    """
    B, D = x.shape
    assert D == WINDOW_SIZE

    # Actual batch tile: multiple of 8 (f32 sublane), no larger than needed.
    tile = min(batch_tile, _round_up(B, 8))
    tile = max(8, (tile // 8) * 8)
    b_pad = _round_up(B, tile)
    if b_pad != B:
        x = jnp.pad(x, ((0, b_pad - B), (0, 0)))

    grid = (b_pad // tile,)

    # x / out tiled over batch; parameters are full-array blocks resident in
    # VMEM (constant index_map) — total param bytes ~0.6 MB in bf16.
    const_map = lambda i: (0, 0)
    batch_map = lambda i: (i, 0)
    in_specs = [pl.BlockSpec((tile, WINDOW_SIZE), batch_map)]
    flat_params = []
    for (w, b) in kernel_params:
        in_specs.append(pl.BlockSpec(w.shape, const_map))
        in_specs.append(pl.BlockSpec(b.shape, const_map))
        flat_params.append(w)
        flat_params.append(b)
    out_spec = pl.BlockSpec((tile, WINDOW_SIZE), batch_map)

    # Scheduler hint: 2*B*sum(in*out) MAC flops, f32 in/out + bf16/f32 params.
    flops = 2 * b_pad * sum(
        FUSED_DIMS[l] * FUSED_DIMS[l + 1] for l in range(NUM_FUSED_LAYERS))
    param_bytes = sum(
        w.size * w.dtype.itemsize + b.size * b.dtype.itemsize
        for (w, b) in kernel_params)
    bytes_accessed = 2 * b_pad * WINDOW_SIZE * 4 + param_bytes

    out = pl.pallas_call(
        _autoencoder_kernel,
        out_shape=jax.ShapeDtypeStruct((b_pad, WINDOW_SIZE), x.dtype),
        grid_spec=pltpu.PrefetchScalarGridSpec(
            num_scalar_prefetch=0,
            grid=grid,
            in_specs=in_specs,
            out_specs=out_spec,
        ),
        compiler_params=pltpu.CompilerParams(
            # Batch axis is independent -> shards across v7x's 2 TensorCores
            # whenever the grid has >= 2 steps.
            dimension_semantics=("parallel",),
            # Explicit scoped-VMEM cap: generous vs. v5e's 16 MiB default,
            # still safe on v7x's 64 MiB physical VMEM.
            vmem_limit_bytes=32 * 1024 * 1024,
        ),
        cost_estimate=pl.CostEstimate(
            flops=flops, transcendentals=0, bytes_accessed=bytes_accessed),
    )(x, *flat_params)

    if b_pad != B:
        out = out[:B]
    return out


def init_params(key):
    """PyTorch nn.Linear default init: U(-k, k), k = 1/sqrt(fan_in).

    Returns 6 layers of (W (in, out), b (out,)) in f32 — the exact math of the
    original module (W already transposed to (in, out))."""
    params = []
    for layer in range(6):
        fan_in, fan_out = DIMS[layer], DIMS[layer + 1]
        key, kw, kb = jax.random.split(key, 3)
        bound = 1.0 / (fan_in ** 0.5)
        w = jax.random.uniform(kw, (fan_in, fan_out), jnp.float32, -bound, bound)
        b = jax.random.uniform(kb, (fan_out,), jnp.float32, -bound, bound)
        params.append((w, b))
    return params


def prepare_kernel_params(params):
    """Fuse the ReLU-free bottleneck pair and cast weights to bf16.

    Input:  6 x (W f32 (in,out), b f32 (out,)).
    Output: 5 x (W bf16 (in,out), b f32 (1,out)).
    Layer 2 (64->16) has no activation, so
        (x @ W2 + b2) @ W3 + b3 == x @ (W2 @ W3) + (b2 @ W3 + b3).
    The fusion is done in f32 on the host, then weights are cast to bf16.
    """
    (w0, b0), (w1, b1), (w2, b2), (w3, b3), (w4, b4), (w5, b5) = params
    w_f = w2 @ w3
    b_f = b2 @ w3 + b3
    fused = [(w0, b0), (w1, b1), (w_f, b_f), (w4, b4), (w5, b5)]
    return [
        (w.astype(jnp.bfloat16), b.reshape(1, -1).astype(jnp.float32))
        for (w, b) in fused
    ]


def reference_forward(x, params):
    """Plain-JAX f32 reference with the original (unfused) 6 layers."""
    h = x
    for layer, (w, b) in enumerate(params):
        h = h @ w + b
        if RELU_AFTER[layer]:
            h = jnp.maximum(h, 0.0)
    return h


if __name__ == "__main__":
    key = jax.random.PRNGKey(0)
    key, kx = jax.random.split(key)

    batch = 16  # small demo batch; the wrapper pads/tiles arbitrary batch sizes
    x = jax.random.normal(kx, (batch, WINDOW_SIZE), jnp.float32)

    params = init_params(key)                      # f32, PyTorch-equivalent
    kernel_params = prepare_kernel_params(params)  # fused + bf16 weights

    out = autoencoder_forward(x, kernel_params, batch_tile=256)
    out = jax.block_until_ready(out)
    assert out.shape == (batch, WINDOW_SIZE)

    ref = reference_forward(x, params)
    # bf16 matmuls with f32 accumulation: allow a few % max relative error
    # against the full-f32 reference.
    rel_err = float(jnp.max(jnp.abs(out - ref)) / (jnp.max(jnp.abs(ref)) + 1e-6))
    assert rel_err < 5e-2, f"mismatch vs reference: rel_err={rel_err}"

    print("KERNEL_OK")
</pallas_src>

<mosaic_0001>
module attributes {stable_mosaic.version = 11 : i64} {
  func.func @_autoencoder_kernel(%arg0: i32, %arg1: memref<16x512xf32, #tpu.memory_space<vmem>>, %arg2: memref<512x256xbf16, #tpu.memory_space<vmem>>, %arg3: memref<1x256xf32, #tpu.memory_space<vmem>>, %arg4: memref<256x64xbf16, #tpu.memory_space<vmem>>, %arg5: memref<1x64xf32, #tpu.memory_space<vmem>>, %arg6: memref<64x64xbf16, #tpu.memory_space<vmem>>, %arg7: memref<1x64xf32, #tpu.memory_space<vmem>>, %arg8: memref<64x256xbf16, #tpu.memory_space<vmem>>, %arg9: memref<1x256xf32, #tpu.memory_space<vmem>>, %arg10: memref<256x512xbf16, #tpu.memory_space<vmem>>, %arg11: memref<1x512xf32, #tpu.memory_space<vmem>>, %arg12: memref<16x512xf32, #tpu.memory_space<vmem>>) attributes {dimension_semantics = [#tpu.dimension_semantics<parallel>], iteration_bounds = array<i64: 1>, scalar_prefetch = 0 : i64, scratch_operands = 0 : i64, tpu.core_type = #tpu.core_type<tc>, window_params = [{transform_indices = @transform_0, window_bounds = array<i64: 16, 512>}, {pipeline_mode = #tpu.pipeline_mode<synchronous>, transform_indices = @transform_1, window_bounds = array<i64: 512, 256>}, {pipeline_mode = #tpu.pipeline_mode<synchronous>, transform_indices = @transform_2, window_bounds = array<i64: 1, 256>}, {pipeline_mode = #tpu.pipeline_mode<synchronous>, transform_indices = @transform_3, window_bounds = array<i64: 256, 64>}, {pipeline_mode = #tpu.pipeline_mode<synchronous>, transform_indices = @transform_4, window_bounds = array<i64: 1, 64>}, {pipeline_mode = #tpu.pipeline_mode<synchronous>, transform_indices = @transform_5, window_bounds = array<i64: 64, 64>}, {pipeline_mode = #tpu.pipeline_mode<synchronous>, transform_indices = @transform_6, window_bounds = array<i64: 1, 64>}, {pipeline_mode = #tpu.pipeline_mode<synchronous>, transform_indices = @transform_7, window_bounds = array<i64: 64, 256>}, {pipeline_mode = #tpu.pipeline_mode<synchronous>, transform_indices = @transform_8, window_bounds = array<i64: 1, 256>}, {pipeline_mode = #tpu.pipeline_mode<synchronous>, transform_indices = @transform_9, window_bounds = array<i64: 256, 512>}, {pipeline_mode = #tpu.pipeline_mode<synchronous>, transform_indices = @transform_10, window_bounds = array<i64: 1, 512>}, {transform_indices = @transform_11, window_bounds = array<i64: 16, 512>}]} {
    %c0 = arith.constant 0 : index
    %c0_0 = arith.constant 0 : index
    %0 = vector.load %arg1[%c0, %c0_0] : memref<16x512xf32, #tpu.memory_space<vmem>>, vector<16x512xf32>
    %c0_1 = arith.constant 0 : index
    %c0_2 = arith.constant 0 : index
    %1 = vector.load %arg2[%c0_1, %c0_2] : memref<512x256xbf16, #tpu.memory_space<vmem>>, vector<512x256xbf16>
    %c0_3 = arith.constant 0 : index
    %c0_4 = arith.constant 0 : index
    %2 = vector.load %arg3[%c0_3, %c0_4] : memref<1x256xf32, #tpu.memory_space<vmem>>, vector<1x256xf32>
    %3 = arith.truncf %0 : vector<16x512xf32> to vector<16x512xbf16>
    %cst = arith.constant dense<0.000000e+00> : vector<16x256xf32>
    %4 = tpu.matmul %3, %1, %cst {dimension_numbers = #tpu.dot_dimension_numbers<[1], [0], [0], [1], [0, 0, 1, 1], [], []>} : vector<16x512xbf16>, vector<512x256xbf16>, vector<16x256xf32> -> vector<16x256xf32>
    %5 = vector.broadcast %2 : vector<1x256xf32> to vector<16x256xf32>
    %6 = arith.addf %4, %5 : vector<16x256xf32>
    %cst_5 = arith.constant 0.000000e+00 : f32
    %7 = vector.broadcast %cst_5 : f32 to vector<16x256xf32>
    %8 = arith.maximumf %6, %7 : vector<16x256xf32>
    %c0_6 = arith.constant 0 : index
    %c0_7 = arith.constant 0 : index
    %9 = vector.load %arg4[%c0_6, %c0_7] : memref<256x64xbf16, #tpu.memory_space<vmem>>, vector<256x64xbf16>
    %c0_8 = arith.constant 0 : index
    %c0_9 = arith.constant 0 : index
    %10 = vector.load %arg5[%c0_8, %c0_9] : memref<1x64xf32, #tpu.memory_space<vmem>>, vector<1x64xf32>
    %11 = arith.truncf %8 : vector<16x256xf32> to vector<16x256xbf16>
    %cst_10 = arith.constant dense<0.000000e+00> : vector<16x64xf32>
    %12 = tpu.matmul %11, %9, %cst_10 {dimension_numbers = #tpu.dot_dimension_numbers<[1], [0], [0], [1], [0, 0, 1, 1], [], []>} : vector<16x256xbf16>, vector<256x64xbf16>, vector<16x64xf32> -> vector<16x64xf32>
    %13 = vector.broadcast %10 : vector<1x64xf32> to vector<16x64xf32>
    %14 = arith.addf %12, %13 : vector<16x64xf32>
    %cst_11 = arith.constant 0.000000e+00 : f32
    %15 = vector.broadcast %cst_11 : f32 to vector<16x64xf32>
    %16 = arith.maximumf %14, %15 : vector<16x64xf32>
    %c0_12 = arith.constant 0 : index
    %c0_13 = arith.constant 0 : index
    %17 = vector.load %arg6[%c0_12, %c0_13] : memref<64x64xbf16, #tpu.memory_space<vmem>>, vector<64x64xbf16>
    %c0_14 = arith.constant 0 : index
    %c0_15 = arith.constant 0 : index
    %18 = vector.load %arg7[%c0_14, %c0_15] : memref<1x64xf32, #tpu.memory_space<vmem>>, vector<1x64xf32>
    %19 = arith.truncf %16 : vector<16x64xf32> to vector<16x64xbf16>
    %cst_16 = arith.constant dense<0.000000e+00> : vector<16x64xf32>
    %20 = tpu.matmul %19, %17, %cst_16 {dimension_numbers = #tpu.dot_dimension_numbers<[1], [0], [0], [1], [0, 0, 1, 1], [], []>} : vector<16x64xbf16>, vector<64x64xbf16>, vector<16x64xf32> -> vector<16x64xf32>
    %21 = vector.broadcast %18 : vector<1x64xf32> to vector<16x64xf32>
    %22 = arith.addf %20, %21 : vector<16x64xf32>
    %cst_17 = arith.constant 0.000000e+00 : f32
    %23 = vector.broadcast %cst_17 : f32 to vector<16x64xf32>
    %24 = arith.maximumf %22, %23 : vector<16x64xf32>
    %c0_18 = arith.constant 0 : index
    %c0_19 = arith.constant 0 : index
    %25 = vector.load %arg8[%c0_18, %c0_19] : memref<64x256xbf16, #tpu.memory_space<vmem>>, vector<64x256xbf16>
    %c0_20 = arith.constant 0 : index
    %c0_21 = arith.constant 0 : index
    %26 = vector.load %arg9[%c0_20, %c0_21] : memref<1x256xf32, #tpu.memory_space<vmem>>, vector<1x256xf32>
    %27 = arith.truncf %24 : vector<16x64xf32> to vector<16x64xbf16>
    %cst_22 = arith.constant dense<0.000000e+00> : vector<16x256xf32>
    %28 = tpu.matmul %27, %25, %cst_22 {dimension_numbers = #tpu.dot_dimension_numbers<[1], [0], [0], [1], [0, 0, 1, 1], [], []>} : vector<16x64xbf16>, vector<64x256xbf16>, vector<16x256xf32> -> vector<16x256xf32>
    %29 = vector.broadcast %26 : vector<1x256xf32> to vector<16x256xf32>
    %30 = arith.addf %28, %29 : vector<16x256xf32>
    %cst_23 = arith.constant 0.000000e+00 : f32
    %31 = vector.broadcast %cst_23 : f32 to vector<16x256xf32>
    %32 = arith.maximumf %30, %31 : vector<16x256xf32>
    %c0_24 = arith.constant 0 : index
    %c0_25 = arith.constant 0 : index
    %33 = vector.load %arg10[%c0_24, %c0_25] : memref<256x512xbf16, #tpu.memory_space<vmem>>, vector<256x512xbf16>
    %c0_26 = arith.constant 0 : index
    %c0_27 = arith.constant 0 : index
    %34 = vector.load %arg11[%c0_26, %c0_27] : memref<1x512xf32, #tpu.memory_space<vmem>>, vector<1x512xf32>
    %35 = arith.truncf %32 : vector<16x256xf32> to vector<16x256xbf16>
    %cst_28 = arith.constant dense<0.000000e+00> : vector<16x512xf32>
    %36 = tpu.matmul %35, %33, %cst_28 {dimension_numbers = #tpu.dot_dimension_numbers<[1], [0], [0], [1], [0, 0, 1, 1], [], []>} : vector<16x256xbf16>, vector<256x512xbf16>, vector<16x512xf32> -> vector<16x512xf32>
    %37 = vector.broadcast %34 : vector<1x512xf32> to vector<16x512xf32>
    %38 = arith.addf %36, %37 : vector<16x512xf32>
    %c0_29 = arith.constant 0 : index
    %c0_30 = arith.constant 0 : index
    %39 = vector.load %arg12[%c0_29, %c0_30] : memref<16x512xf32, #tpu.memory_space<vmem>>, vector<16x512xf32>
    tpu.vector_store %arg12[%c0_29, %c0_30], %38 {strides = array<i32>} : memref<16x512xf32, #tpu.memory_space<vmem>>, vector<16x512xf32>,
    return
  }
  func.func @transform_0(%arg0: i32) -> (i32, i32) {
    %c0_i32 = arith.constant 0 : i32
    %c0_i32_0 = arith.constant 0 : i32
    return %arg0, %c0_i32 : i32, i32
  }
  func.func @transform_1(%arg0: i32) -> (i32, i32) {
    %c0_i32 = arith.constant 0 : i32
    %c0_i32_0 = arith.constant 0 : i32
    %c0_i32_1 = arith.constant 0 : i32
    return %c0_i32, %c0_i32_0 : i32, i32
  }
  func.func @transform_2(%arg0: i32) -> (i32, i32) {
    %c0_i32 = arith.constant 0 : i32
    %c0_i32_0 = arith.constant 0 : i32
    %c0_i32_1 = arith.constant 0 : i32
    return %c0_i32, %c0_i32_0 : i32, i32
  }
  func.func @transform_3(%arg0: i32) -> (i32, i32) {
    %c0_i32 = arith.constant 0 : i32
    %c0_i32_0 = arith.constant 0 : i32
    %c0_i32_1 = arith.constant 0 : i32
    return %c0_i32, %c0_i32_0 : i32, i32
  }
  func.func @transform_4(%arg0: i32) -> (i32, i32) {
    %c0_i32 = arith.constant 0 : i32
    %c0_i32_0 = arith.constant 0 : i32
    %c0_i32_1 = arith.constant 0 : i32
    return %c0_i32, %c0_i32_0 : i32, i32
  }
  func.func @transform_5(%arg0: i32) -> (i32, i32) {
    %c0_i32 = arith.constant 0 : i32
    %c0_i32_0 = arith.constant 0 : i32
    %c0_i32_1 = arith.constant 0 : i32
    return %c0_i32, %c0_i32_0 : i32, i32
  }
  func.func @transform_6(%arg0: i32) -> (i32, i32) {
    %c0_i32 = arith.constant 0 : i32
    %c0_i32_0 = arith.constant 0 : i32
    %c0_i32_1 = arith.constant 0 : i32
    return %c0_i32, %c0_i32_0 : i32, i32
  }
  func.func @transform_7(%arg0: i32) -> (i32, i32) {
    %c0_i32 = arith.constant 0 : i32
    %c0_i32_0 = arith.constant 0 : i32
    %c0_i32_1 = arith.constant 0 : i32
    return %c0_i32, %c0_i32_0 : i32, i32
  }
  func.func @transform_8(%arg0: i32) -> (i32, i32) {
    %c0_i32 = arith.constant 0 : i32
    %c0_i32_0 = arith.constant 0 : i32
    %c0_i32_1 = arith.constant 0 : i32
    return %c0_i32, %c0_i32_0 : i32, i32
  }
  func.func @transform_9(%arg0: i32) -> (i32, i32) {
    %c0_i32 = arith.constant 0 : i32
    %c0_i32_0 = arith.constant 0 : i32
    %c0_i32_1 = arith.constant 0 : i32
    return %c0_i32, %c0_i32_0 : i32, i32
  }
  func.func @transform_10(%arg0: i32) -> (i32, i32) {
    %c0_i32 = arith.constant 0 : i32
    %c0_i32_0 = arith.constant 0 : i32
    %c0_i32_1 = arith.constant 0 : i32
    return %c0_i32, %c0_i32_0 : i32, i32
  }
  func.func @transform_11(%arg0: i32) -> (i32, i32) {
    %c0_i32 = arith.constant 0 : i32
    %c0_i32_0 = arith.constant 0 : i32
    return %arg0, %c0_i32 : i32, i32
  }
}

</mosaic_0001>

<llo_original>
// kernel: autoencoder_forward.1
$region0: #{autoencoder_forward.1}
  #allocation0 [shape = 'u32[]', space=smem, size = 0x4, offset = 0x4, fixed_abs, tag = 'smem constant byte address 0x4 - core index']
  #allocation1 [shape = 'u32[72,128]{1,0:T(1,128)}', space=vmem, size = 0x9000, scoped, tag = 'internal scratch']
  %s0 = inlined_call_operand.vmem [shape: f32[16,512], index: 0, kind: input, shape index: {}]
  %s1 = inlined_call_operand.hbm [shape: bf16[512,256], index: 1, kind: input, shape index: {}]
  %s2 = inlined_call_operand.vmem [shape: f32[1,256], index: 2, kind: input, shape index: {}]
  %s3 = inlined_call_operand.vmem [shape: bf16[256,64], index: 3, kind: input, shape index: {}]
  %s4 = inlined_call_operand.vmem [shape: f32[1,64], index: 4, kind: input, shape index: {}]
  %s5 = inlined_call_operand.vmem [shape: bf16[64,64], index: 5, kind: input, shape index: {}]
  %s6 = inlined_call_operand.vmem [shape: f32[1,64], index: 6, kind: input, shape index: {}]
  %s7 = inlined_call_operand.vmem [shape: bf16[64,256], index: 7, kind: input, shape index: {}]
  %s8 = inlined_call_operand.vmem [shape: f32[1,256], index: 8, kind: input, shape index: {}]
  %s9 = inlined_call_operand.hbm [shape: bf16[256,512], index: 9, kind: input, shape index: {}]
  %s10 = inlined_call_operand.vmem [shape: f32[1,512], index: 10, kind: input, shape index: {}]
  %s11 = inlined_call_operand.hbm [shape: f32[16,512], index: 11, kind: output, shape index: {}]
  %s12 = sld [smem:[#allocation0]]
  $region62: #{autoencoder_forward.1} parent=0
    _
  %s14 = ssub.s32 1, %s12
  %s15 = scalar_select 0, %s14, %s12
  $region1: #{autoencoder_forward.1} parent=0
    #allocation2 [shape = 'u8[262144]{0}', space=vmem, size = 0x40000, scoped, tag = 'input window, operand 1, single buffered']
    #allocation3 [shape = 's32[1]{0}', space=sflag, size = 0x4, scoped, tag = 'scoped memory for autoencoder_forward.1']
    #allocation4 [shape = 's32[1]{0}', space=sflag, size = 0x4, scoped, tag = 'scoped memory for autoencoder_forward.1']
    #allocation5 [shape = 'u8[262144]{0}', space=vmem, size = 0x40000, scoped, tag = 'input window, operand 9, single buffered']
    #allocation6 [shape = 's32[1]{0}', space=sflag, size = 0x4, scoped, tag = 'scoped memory for autoencoder_forward.1']
    #allocation7 [shape = 'u8[32768]{0}', space=vmem, size = 0x8000, scoped, tag = 'output window, operand 0, single buffered']
    %16 = vsyncpa [#allocation3], 0
    %17 = vsyncpa [#allocation6], 0
    %18 = vsyncpa [#allocation4], 0
    // Predicated region
    $region2: #{autoencoder_forward.1} parent=1 // pred_check
      _
    $region3: #{autoencoder_forward.1} parent=1 // pred_check_branch
      %20 = sbr.rel (0) target = $region5
    $region4: #{autoencoder_forward.1} parent=1 // pred_region
      _
    $region5: #{autoencoder_forward.1} parent=1 // pred_fallthru
      _
    // Predicated region
    $region6: #{autoencoder_forward.1} parent=1 // pred_check
      _
    $region7: #{autoencoder_forward.1} parent=1 // pred_check_branch
      %22 = sbr.rel (0) target = $region9
    $region8: #{autoencoder_forward.1} parent=1 // pred_region
      %24 = vsyncadd [#allocation3], 0
      %s25 = sshll.u32 %s1, 4
      %s26 = int_to_ptr.hbm [resolvable:$true] %s25
      %s27 = sshll.u32 [#allocation2], 4
      %s28 = int_to_ptr.vmem [resolvable:$true] %s27
      %33 = dma.hbm_to_vmem [thread:$0]  %s26, 8192, %s28, [#allocation3], 128, 128, 8
    $region9: #{autoencoder_forward.1} parent=1 // pred_fallthru
      _
    // Predicated region
    $region10: #{autoencoder_forward.1} parent=1 // pred_check
      _
    $region11: #{autoencoder_forward.1} parent=1 // pred_check_branch
      %35 = sbr.rel (0) target = $region13
    $region12: #{autoencoder_forward.1} parent=1 // pred_region
      _
    $region13: #{autoencoder_forward.1} parent=1 // pred_fallthru
      _
    // Predicated region
    $region14: #{autoencoder_forward.1} parent=1 // pred_check
      _
    $region15: #{autoencoder_forward.1} parent=1 // pred_check_branch
      %37 = sbr.rel (0) target = $region17
    $region16: #{autoencoder_forward.1} parent=1 // pred_region
      _
    $region17: #{autoencoder_forward.1} parent=1 // pred_fallthru
      _
    // Predicated region
    $region18: #{autoencoder_forward.1} parent=1 // pred_check
      _
    $region19: #{autoencoder_forward.1} parent=1 // pred_check_branch
      %39 = sbr.rel (0) target = $region21
    $region20: #{autoencoder_forward.1} parent=1 // pred_region
      _
    $region21: #{autoencoder_forward.1} parent=1 // pred_fallthru
      _
    // Predicated region
    $region22: #{autoencoder_forward.1} parent=1 // pred_check
      _
    $region23: #{autoencoder_forward.1} parent=1 // pred_check_branch
      %41 = sbr.rel (0) target = $region25
    $region24: #{autoencoder_forward.1} parent=1 // pred_region
      _
    $region25: #{autoencoder_forward.1} parent=1 // pred_fallthru
      _
    // Predicated region
    $region26: #{autoencoder_forward.1} parent=1 // pred_check
      _
    $region27: #{autoencoder_forward.1} parent=1 // pred_check_branch
      %43 = sbr.rel (0) target = $region29
    $region28: #{autoencoder_forward.1} parent=1 // pred_region
      _
    $region29: #{autoencoder_forward.1} parent=1 // pred_fallthru
      _
    // Predicated region
    $region30: #{autoencoder_forward.1} parent=1 // pred_check
      _
    $region31: #{autoencoder_forward.1} parent=1 // pred_check_branch
      %45 = sbr.rel (0) target = $region33
    $region32: #{autoencoder_forward.1} parent=1 // pred_region
      _
    $region33: #{autoencoder_forward.1} parent=1 // pred_fallthru
      _
    // Predicated region
    $region34: #{autoencoder_forward.1} parent=1 // pred_check
      _
    $region35: #{autoencoder_forward.1} parent=1 // pred_check_branch
      %47 = sbr.rel (0) target = $region37
    $region36: #{autoencoder_forward.1} parent=1 // pred_region
      _
    $region37: #{autoencoder_forward.1} parent=1 // pred_fallthru
      _
    // Predicated region
    $region38: #{autoencoder_forward.1} parent=1 // pred_check
      _
    $region39: #{autoencoder_forward.1} parent=1 // pred_check_branch
      %49 = sbr.rel (0) target = $region41
    $region40: #{autoencoder_forward.1} parent=1 // pred_region
      %51 = vsyncadd [#allocation6], 0
      %s52 = sshll.u32 %s9, 4
      %s53 = int_to_ptr.hbm [resolvable:$true] %s52
      %s54 = sshll.u32 [#allocation5], 4
      %s55 = int_to_ptr.vmem [resolvable:$true] %s54
      %60 = dma.hbm_to_vmem [thread:$0]  %s53, 8192, %s55, [#allocation6], 256, 256, 16
    $region41: #{autoencoder_forward.1} parent=1 // pred_fallthru
      _
    // Predicated region
    $region42: #{autoencoder_forward.1} parent=1 // pred_check
      _
    $region43: #{autoencoder_forward.1} parent=1 // pred_check_branch
      %62 = sbr.rel (0) target = $region45
    $region44: #{autoencoder_forward.1} parent=1 // pred_region
      _
    $region45: #{autoencoder_forward.1} parent=1 // pred_fallthru
      _
    // Predicated region
    $region46: #{autoencoder_forward.1} parent=1 // pred_check
      _
    $region47: #{autoencoder_forward.1} parent=1 // pred_check_branch
      %64 = sbr.rel (0) target = $region49
    $region48: #{autoencoder_forward.1} parent=1 // pred_region
      %66 = dma.done [#allocation3], 8192
    $region49: #{autoencoder_forward.1} parent=1 // pred_fallthru
      _
    // Predicated region
    $region50: #{autoencoder_forward.1} parent=1 // pred_check
      _
    $region51: #{autoencoder_forward.1} parent=1 // pred_check_branch
      %68 = sbr.rel (0) target = $region53
    $region52: #{autoencoder_forward.1} parent=1 // pred_region
      %70 = dma.done [#allocation6], 8192
    $region53: #{autoencoder_forward.1} parent=1 // pred_fallthru
      _
    %v72 = vld [vmem:[%s0] sm:$0xff]
    %v73 = vld [vmem:[%s0 + $0x8] sm:$0xff]
    %v74 = vld [vmem:[%s0 + $0x10] sm:$0xff]
    %v75 = vld [vmem:[%s0 + $0x18] sm:$0xff]
    %v76 = vld [vmem:[%s0 + $0x20] sm:$0xff]
    %v77 = vld [vmem:[%s0 + $0x28] sm:$0xff]
    %v78 = vld [vmem:[%s0 + $0x30] sm:$0xff]
    %v79 = vld [vmem:[%s0 + $0x38] sm:$0xff]
    %v80 = vld [vmem:[#allocation2] sm:$0xff]
    %v81 = vld [vmem:[#allocation2 + $0x8] sm:$0xff]
    %v82 = vld [vmem:[#allocation2 + $0x10] sm:$0xff]
    %v83 = vld [vmem:[#allocation2 + $0x18] sm:$0xff]
    %v84 = vld [vmem:[#allocation2 + $0x20] sm:$0xff]
    %v85 = vld [vmem:[#allocation2 + $0x28] sm:$0xff]
    %v86 = vld [vmem:[#allocation2 + $0x30] sm:$0xff]
    %v87 = vld [vmem:[#allocation2 + $0x38] sm:$0xff]
    %v88 = vld [vmem:[#allocation2 + $0x40] sm:$0xff]
    %v89 = vld [vmem:[#allocation2 + $0x48] sm:$0xff]
    %v90 = vld [vmem:[#allocation2 + $0x50] sm:$0xff]
    %v91 = vld [vmem:[#allocation2 + $0x58] sm:$0xff]
    %v92 = vld [vmem:[#allocation2 + $0x60] sm:$0xff]
    %v93 = vld [vmem:[#allocation2 + $0x68] sm:$0xff]
    %v94 = vld [vmem:[#allocation2 + $0x70] sm:$0xff]
    %v95 = vld [vmem:[#allocation2 + $0x78] sm:$0xff]
    %v96 = vld [vmem:[#allocation2 + $0x80] sm:$0xff]
    %v97 = vld [vmem:[#allocation2 + $0x88] sm:$0xff]
    %v98 = vld [vmem:[#allocation2 + $0x90] sm:$0xff]
    %v99 = vld [vmem:[#allocation2 + $0x98] sm:$0xff]
    %v100 = vld [vmem:[#allocation2 + $0xa0] sm:$0xff]
    %v101 = vld [vmem:[#allocation2 + $0xa8] sm:$0xff]
    %v102 = vld [vmem:[#allocation2 + $0xb0] sm:$0xff]
    %v103 = vld [vmem:[#allocation2 + $0xb8] sm:$0xff]
    %v104 = vld [vmem:[#allocation2 + $0xc0] sm:$0xff]
    %v105 = vld [vmem:[#allocation2 + $0xc8] sm:$0xff]
    %v106 = vld [vmem:[#allocation2 + $0xd0] sm:$0xff]
    %v107 = vld [vmem:[#allocation2 + $0xd8] sm:$0xff]
    %v108 = vld [vmem:[#allocation2 + $0xe0] sm:$0xff]
    %v109 = vld [vmem:[#allocation2 + $0xe8] sm:$0xff]
    %v110 = vld [vmem:[#allocation2 + $0xf0] sm:$0xff]
    %v111 = vld [vmem:[#allocation2 + $0xf8] sm:$0xff]
    %v112 = vld [vmem:[#allocation2 + $0x100] sm:$0xff]
    %v113 = vld [vmem:[#allocation2 + $0x108] sm:$0xff]
    %v114 = vld [vmem:[#allocation2 + $0x110] sm:$0xff]
    %v115 = vld [vmem:[#allocation2 + $0x118] sm:$0xff]
    %v116 = vld [vmem:[#allocation2 + $0x120] sm:$0xff]
    %v117 = vld [vmem:[#allocation2 + $0x128] sm:$0xff]
    %v118 = vld [vmem:[#allocation2 + $0x130] sm:$0xff]
    %v119 = vld [vmem:[#allocation2 + $0x138] sm:$0xff]
    %v120 = vld [vmem:[#allocation2 + $0x140] sm:$0xff]
    %v121 = vld [vmem:[#allocation2 + $0x148] sm:$0xff]
    %v122 = vld [vmem:[#allocation2 + $0x150] sm:$0xff]
    %v123 = vld [vmem:[#allocation2 + $0x158] sm:$0xff]
    %v124 = vld [vmem:[#allocation2 + $0x160] sm:$0xff]
    %v125 = vld [vmem:[#allocation2 + $0x168] sm:$0xff]
    %v126 = vld [vmem:[#allocation2 + $0x170] sm:$0xff]
    %v127 = vld [vmem:[#allocation2 + $0x178] sm:$0xff]
    %v128 = vld [vmem:[#allocation2 + $0x180] sm:$0xff]
    %v129 = vld [vmem:[#allocation2 + $0x188] sm:$0xff]
    %v130 = vld [vmem:[#allocation2 + $0x190] sm:$0xff]
    %v131 = vld [vmem:[#allocation2 + $0x198] sm:$0xff]
    %v132 = vld [vmem:[#allocation2 + $0x1a0] sm:$0xff]
    %v133 = vld [vmem:[#allocation2 + $0x1a8] sm:$0xff]
    %v134 = vld [vmem:[#allocation2 + $0x1b0] sm:$0xff]
    %v135 = vld [vmem:[#allocation2 + $0x1b8] sm:$0xff]
    %v136 = vld [vmem:[#allocation2 + $0x1c0] sm:$0xff]
    %v137 = vld [vmem:[#allocation2 + $0x1c8] sm:$0xff]
    %v138 = vld [vmem:[#allocation2 + $0x1d0] sm:$0xff]
    %v139 = vld [vmem:[#allocation2 + $0x1d8] sm:$0xff]
    %v140 = vld [vmem:[#allocation2 + $0x1e0] sm:$0xff]
    %v141 = vld [vmem:[#allocation2 + $0x1e8] sm:$0xff]
    %v142 = vld [vmem:[#allocation2 + $0x1f0] sm:$0xff]
    %v143 = vld [vmem:[#allocation2 + $0x1f8] sm:$0xff]
    %v144 = vld [vmem:[%s2] sm:$0x3]
    %v145 = vpack.c.bf16 %v76, %v72
    %v146 = vpack.c.bf16 %v77, %v73
    %v147 = vpack.c.bf16 %v78, %v74
    %v148 = vpack.c.bf16 %v79, %v75
    %v150 = vperm.slane %v144, 0
    %v151 = vperm.slane %v144, 1
    %v218 = vunpack.c.l.b16 %v80
    %v219 = vunpack.c.h.b16 %v80
    %v220 = vunpack.c.l.b16 %v81
    %v221 = vunpack.c.h.b16 %v81
    %v222 = vunpack.c.l.b16 %v82
    %v223 = vunpack.c.h.b16 %v82
    %v224 = vunpack.c.l.b16 %v83
    %v225 = vunpack.c.h.b16 %v83
    %v226 = vunpack.c.l.b16 %v84
    %v227 = vunpack.c.h.b16 %v84
    %v228 = vunpack.c.l.b16 %v85
    %v229 = vunpack.c.h.b16 %v85
    %v230 = vunpack.c.l.b16 %v86
    %v231 = vunpack.c.h.b16 %v86
    %v232 = vunpack.c.l.b16 %v87
    %v233 = vunpack.c.h.b16 %v87
    %v234 = vunpack.c.l.b16 %v88
    %v235 = vunpack.c.h.b16 %v88
    %v236 = vunpack.c.l.b16 %v89
    %v237 = vunpack.c.h.b16 %v89
    %v238 = vunpack.c.l.b16 %v90
    %v239 = vunpack.c.h.b16 %v90
    %v240 = vunpack.c.l.b16 %v91
    %v241 = vunpack.c.h.b16 %v91
    %v242 = vunpack.c.l.b16 %v92
    %v243 = vunpack.c.h.b16 %v92
    %v244 = vunpack.c.l.b16 %v93
    %v245 = vunpack.c.h.b16 %v93
    %v246 = vunpack.c.l.b16 %v94
    %v247 = vunpack.c.h.b16 %v94
    %v248 = vunpack.c.l.b16 %v95
    %v249 = vunpack.c.h.b16 %v95
    %v250 = vunpack.c.l.b16 %v96
    %v251 = vunpack.c.h.b16 %v96
    %v252 = vunpack.c.l.b16 %v97
    %v253 = vunpack.c.h.b16 %v97
    %v254 = vunpack.c.l.b16 %v98
    %v255 = vunpack.c.h.b16 %v98
    %v256 = vunpack.c.l.b16 %v99
    %v257 = vunpack.c.h.b16 %v99
    %v258 = vunpack.c.l.b16 %v100
    %v259 = vunpack.c.h.b16 %v100
    %v260 = vunpack.c.l.b16 %v101
    %v261 = vunpack.c.h.b16 %v101
    %v262 = vunpack.c.l.b16 %v102
    %v263 = vunpack.c.h.b16 %v102
    %v264 = vunpack.c.l.b16 %v103
    %v265 = vunpack.c.h.b16 %v103
    %v266 = vunpack.c.l.b16 %v104
    %v267 = vunpack.c.h.b16 %v104
    %v268 = vunpack.c.l.b16 %v105
    %v269 = vunpack.c.h.b16 %v105
    %v270 = vunpack.c.l.b16 %v106
    %v271 = vunpack.c.h.b16 %v106
    %v272 = vunpack.c.l.b16 %v107
    %v273 = vunpack.c.h.b16 %v107
    %v274 = vunpack.c.l.b16 %v108
    %v275 = vunpack.c.h.b16 %v108
    %v276 = vunpack.c.l.b16 %v109
    %v277 = vunpack.c.h.b16 %v109
    %v278 = vunpack.c.l.b16 %v110
    %v279 = vunpack.c.h.b16 %v110
    %v280 = vunpack.c.l.b16 %v111
    %v281 = vunpack.c.h.b16 %v111
    %v282 = vunpack.c.l.b16 %v112
    %v283 = vunpack.c.h.b16 %v112
    %v284 = vunpack.c.l.b16 %v113
    %v285 = vunpack.c.h.b16 %v113
    %v286 = vunpack.c.l.b16 %v114
    %v287 = vunpack.c.h.b16 %v114
    %v288 = vunpack.c.l.b16 %v115
    %v289 = vunpack.c.h.b16 %v115
    %v290 = vunpack.c.l.b16 %v116
    %v291 = vunpack.c.h.b16 %v116
    %v292 = vunpack.c.l.b16 %v117
    %v293 = vunpack.c.h.b16 %v117
    %v294 = vunpack.c.l.b16 %v118
    %v295 = vunpack.c.h.b16 %v118
    %v296 = vunpack.c.l.b16 %v119
    %v297 = vunpack.c.h.b16 %v119
    %v298 = vunpack.c.l.b16 %v120
    %v299 = vunpack.c.h.b16 %v120
    %v300 = vunpack.c.l.b16 %v121
    %v301 = vunpack.c.h.b16 %v121
    %v302 = vunpack.c.l.b16 %v122
    %v303 = vunpack.c.h.b16 %v122
    %v304 = vunpack.c.l.b16 %v123
    %v305 = vunpack.c.h.b16 %v123
    %v306 = vunpack.c.l.b16 %v124
    %v307 = vunpack.c.h.b16 %v124
    %v308 = vunpack.c.l.b16 %v125
    %v309 = vunpack.c.h.b16 %v125
    %v310 = vunpack.c.l.b16 %v126
    %v311 = vunpack.c.h.b16 %v126
    %v312 = vunpack.c.l.b16 %v127
    %v313 = vunpack.c.h.b16 %v127
    %v314 = vunpack.c.l.b16 %v128
    %v315 = vunpack.c.h.b16 %v128
    %v316 = vunpack.c.l.b16 %v129
    %v317 = vunpack.c.h.b16 %v129
    %v318 = vunpack.c.l.b16 %v130
    %v319 = vunpack.c.h.b16 %v130
    %v320 = vunpack.c.l.b16 %v131
    %v321 = vunpack.c.h.b16 %v131
    %v322 = vunpack.c.l.b16 %v132
    %v323 = vunpack.c.h.b16 %v132
    %v324 = vunpack.c.l.b16 %v133
    %v325 = vunpack.c.h.b16 %v133
    %v326 = vunpack.c.l.b16 %v134
    %v327 = vunpack.c.h.b16 %v134
    %v328 = vunpack.c.l.b16 %v135
    %v329 = vunpack.c.h.b16 %v135
    %v330 = vunpack.c.l.b16 %v136
    %v331 = vunpack.c.h.b16 %v136
    %v332 = vunpack.c.l.b16 %v137
    %v333 = vunpack.c.h.b16 %v137
    %v334 = vunpack.c.l.b16 %v138
    %v335 = vunpack.c.h.b16 %v138
    %v336 = vunpack.c.l.b16 %v139
    %v337 = vunpack.c.h.b16 %v139
    %v338 = vunpack.c.l.b16 %v140
    %v339 = vunpack.c.h.b16 %v140
    %v340 = vunpack.c.l.b16 %v141
    %v341 = vunpack.c.h.b16 %v141
    %v342 = vunpack.c.l.b16 %v142
    %v343 = vunpack.c.h.b16 %v142
    %v344 = vunpack.c.l.b16 %v143
    %v345 = vunpack.c.h.b16 %v143
    %v346 = vpack.c.b16 %v220, %v218
    %v347 = vpack.c.b16 %v221, %v219
    %v348 = vpack.c.b16 %v224, %v222
    %v349 = vpack.c.b16 %v225, %v223
    %v350 = vpack.c.b16 %v228, %v226
    %v351 = vpack.c.b16 %v229, %v227
    %v352 = vpack.c.b16 %v232, %v230
    %v353 = vpack.c.b16 %v233, %v231
    %v354 = vpack.c.b16 %v236, %v234
    %v355 = vpack.c.b16 %v237, %v235
    %v356 = vpack.c.b16 %v240, %v238
    %v357 = vpack.c.b16 %v241, %v239
    %v358 = vpack.c.b16 %v244, %v242
    %v359 = vpack.c.b16 %v245, %v243
    %v360 = vpack.c.b16 %v248, %v246
    %v361 = vpack.c.b16 %v249, %v247
    %v362 = vpack.c.b16 %v252, %v250
    %v363 = vpack.c.b16 %v253, %v251
    %v364 = vpack.c.b16 %v256, %v254
    %v365 = vpack.c.b16 %v257, %v255
    %v366 = vpack.c.b16 %v260, %v258
    %v367 = vpack.c.b16 %v261, %v259
    %v368 = vpack.c.b16 %v264, %v262
    %v369 = vpack.c.b16 %v265, %v263
    %v370 = vpack.c.b16 %v268, %v266
    %v371 = vpack.c.b16 %v269, %v267
    %v372 = vpack.c.b16 %v272, %v270
    %v373 = vpack.c.b16 %v273, %v271
    %v374 = vpack.c.b16 %v276, %v274
    %v375 = vpack.c.b16 %v277, %v275
    %v376 = vpack.c.b16 %v280, %v278
    %v377 = vpack.c.b16 %v281, %v279
    %v378 = vpack.c.b16 %v284, %v282
    %v379 = vpack.c.b16 %v285, %v283
    %v380 = vpack.c.b16 %v288, %v286
    %v381 = vpack.c.b16 %v289, %v287
    %v382 = vpack.c.b16 %v292, %v290
    %v383 = vpack.c.b16 %v293, %v291
    %v384 = vpack.c.b16 %v296, %v294
    %v385 = vpack.c.b16 %v297, %v295
    %v386 = vpack.c.b16 %v300, %v298
    %v387 = vpack.c.b16 %v301, %v299
    %v388 = vpack.c.b16 %v304, %v302
    %v389 = vpack.c.b16 %v305, %v303
    %v390 = vpack.c.b16 %v308, %v306
    %v391 = vpack.c.b16 %v309, %v307
    %v392 = vpack.c.b16 %v312, %v310
    %v393 = vpack.c.b16 %v313, %v311
    %v394 = vpack.c.b16 %v316, %v314
    %v395 = vpack.c.b16 %v317, %v315
    %v396 = vpack.c.b16 %v320, %v318
    %v397 = vpack.c.b16 %v321, %v319
    %v398 = vpack.c.b16 %v324, %v322
    %v399 = vpack.c.b16 %v325, %v323
    %v400 = vpack.c.b16 %v328, %v326
    %v401 = vpack.c.b16 %v329, %v327
    %v402 = vpack.c.b16 %v332, %v330
    %v403 = vpack.c.b16 %v333, %v331
    %v404 = vpack.c.b16 %v336, %v334
    %v405 = vpack.c.b16 %v337, %v335
    %v406 = vpack.c.b16 %v340, %v338
    %v407 = vpack.c.b16 %v341, %v339
    %v408 = vpack.c.b16 %v344, %v342
    %v409 = vpack.c.b16 %v345, %v343
    %474 = vmatpush.bf16.msra.mxu0 %v360
    %475 = vmatpush.bf16.msra.mxu0 %v358
    %476 = vmatpush.bf16.msra.mxu0 %v356
    %477 = vmatpush.bf16.msra.mxu0 %v354
    %478 = vmatpush.bf16.msra.mxu0 %v352
    %479 = vmatpush.bf16.msra.mxu0 %v350
    %480 = vmatpush.bf16.msra.mxu0 %v348
    %481 = vmatpush.bf16.msra.mxu0 %v346
    %482 = vmatmul.bf16.gmra.mxu0 %v145
    %v483 = vpop.f32.mrf.mxu0
    %v484 = vadd.f32 %v150, %v483
    %v485 = vpop.f32.mrf.mxu0
    %v486 = vadd.f32 %v150, %v485
    %487 = vdwg.mxu0
    %488 = vmatpush.bf16.msra.mxu0 %v376
    %489 = vmatpush.bf16.msra.mxu0 %v374
    %490 = vmatpush.bf16.msra.mxu0 %v372
    %491 = vmatpush.bf16.msra.mxu0 %v370
    %492 = vmatpush.bf16.msra.mxu0 %v368
    %493 = vmatpush.bf16.msra.mxu0 %v366
    %494 = vmatpush.bf16.msra.mxu0 %v364
    %495 = vmatpush.bf16.msra.mxu0 %v362
    %496 = vmatmul.bf16.gmra.mxu0 %v146
    %v497 = vpop.f32.mrf.mxu0
    %v498 = vadd.f32 %v484, %v497
    %v499 = vpop.f32.mrf.mxu0
    %v500 = vadd.f32 %v486, %v499
    %501 = vdwg.mxu0
    %502 = vmatpush.bf16.msra.mxu0 %v392
    %503 = vmatpush.bf16.msra.mxu0 %v390
    %504 = vmatpush.bf16.msra.mxu0 %v388
    %505 = vmatpush.bf16.msra.mxu0 %v386
    %506 = vmatpush.bf16.msra.mxu0 %v384
    %507 = vmatpush.bf16.msra.mxu0 %v382
    %508 = vmatpush.bf16.msra.mxu0 %v380
    %509 = vmatpush.bf16.msra.mxu0 %v378
    %510 = vmatmul.bf16.gmra.mxu0 %v147
    %v511 = vpop.f32.mrf.mxu0
    %v512 = vadd.f32 %v498, %v511
    %v513 = vpop.f32.mrf.mxu0
    %v514 = vadd.f32 %v500, %v513
    %515 = vdwg.mxu0
    %516 = vmatpush.bf16.msra.mxu0 %v408
    %517 = vmatpush.bf16.msra.mxu0 %v406
    %518 = vmatpush.bf16.msra.mxu0 %v404
    %519 = vmatpush.bf16.msra.mxu0 %v402
    %520 = vmatpush.bf16.msra.mxu0 %v400
    %521 = vmatpush.bf16.msra.mxu0 %v398
    %522 = vmatpush.bf16.msra.mxu0 %v396
    %523 = vmatpush.bf16.msra.mxu0 %v394
    %524 = vmatmul.bf16.gmra.mxu0 %v148
    %v525 = vpop.f32.mrf.mxu0
    %v526 = vadd.f32 %v512, %v525
    %v527 = vpop.f32.mrf.mxu0
    %v528 = vadd.f32 %v514, %v527
    %529 = vdwg.mxu0
    %530 = vmatpush.bf16.msra.mxu0 %v361
    %531 = vmatpush.bf16.msra.mxu0 %v359
    %532 = vmatpush.bf16.msra.mxu0 %v357
    %533 = vmatpush.bf16.msra.mxu0 %v355
    %534 = vmatpush.bf16.msra.mxu0 %v353
    %535 = vmatpush.bf16.msra.mxu0 %v351
    %536 = vmatpush.bf16.msra.mxu0 %v349
    %537 = vmatpush.bf16.msra.mxu0 %v347
    %538 = vmatmul.bf16.gmra.mxu0 %v145
    %v539 = vpop.f32.mrf.mxu0
    %v540 = vadd.f32 %v151, %v539
    %v541 = vpop.f32.mrf.mxu0
    %v542 = vadd.f32 %v151, %v541
    %543 = vdwg.mxu0
    %544 = vmatpush.bf16.msra.mxu0 %v377
    %545 = vmatpush.bf16.msra.mxu0 %v375
    %546 = vmatpush.bf16.msra.mxu0 %v373
    %547 = vmatpush.bf16.msra.mxu0 %v371
    %548 = vmatpush.bf16.msra.mxu0 %v369
    %549 = vmatpush.bf16.msra.mxu0 %v367
    %550 = vmatpush.bf16.msra.mxu0 %v365
    %551 = vmatpush.bf16.msra.mxu0 %v363
    %552 = vmatmul.bf16.gmra.mxu0 %v146
    %v553 = vpop.f32.mrf.mxu0
    %v554 = vadd.f32 %v540, %v553
    %v555 = vpop.f32.mrf.mxu0
    %v556 = vadd.f32 %v542, %v555
    %557 = vdwg.mxu0
    %558 = vmatpush.bf16.msra.mxu0 %v393
    %559 = vmatpush.bf16.msra.mxu0 %v391
    %560 = vmatpush.bf16.msra.mxu0 %v389
    %561 = vmatpush.bf16.msra.mxu0 %v387
    %562 = vmatpush.bf16.msra.mxu0 %v385
    %563 = vmatpush.bf16.msra.mxu0 %v383
    %564 = vmatpush.bf16.msra.mxu0 %v381
    %565 = vmatpush.bf16.msra.mxu0 %v379
    %566 = vmatmul.bf16.gmra.mxu0 %v147
    %v567 = vpop.f32.mrf.mxu0
    %v568 = vadd.f32 %v554, %v567
    %v569 = vpop.f32.mrf.mxu0
    %v570 = vadd.f32 %v556, %v569
    %571 = vdwg.mxu0
    %572 = vmatpush.bf16.msra.mxu0 %v409
    %573 = vmatpush.bf16.msra.mxu0 %v407
    %574 = vmatpush.bf16.msra.mxu0 %v405
    %575 = vmatpush.bf16.msra.mxu0 %v403
    %576 = vmatpush.bf16.msra.mxu0 %v401
    %577 = vmatpush.bf16.msra.mxu0 %v399
    %578 = vmatpush.bf16.msra.mxu0 %v397
    %579 = vmatpush.bf16.msra.mxu0 %v395
    %580 = vmatmul.bf16.gmra.mxu0 %v148
    %v581 = vpop.f32.mrf.mxu0
    %v582 = vadd.f32 %v568, %v581
    %v583 = vpop.f32.mrf.mxu0
    %v584 = vadd.f32 %v570, %v583
    %585 = vdwg.mxu0
    %v586 = vmax.f32 %v526, 0.0
    %v587 = vmax.f32 %v582, 0.0
    %v588 = vmax.f32 %v528, 0.0
    %v589 = vmax.f32 %v584, 0.0
    %v590 = vld [vmem:[%s3] sm:$0xf]
    %v591 = vld [vmem:[%s3 + $0x4] sm:$0xf]
    %v592 = vld [vmem:[%s3 + $0x8] sm:$0xf]
    %v593 = vld [vmem:[%s3 + $0xc] sm:$0xf]
    %v594 = vld [vmem:[%s3 + $0x10] sm:$0xf]
    %v595 = vld [vmem:[%s3 + $0x14] sm:$0xf]
    %v596 = vld [vmem:[%s3 + $0x18] sm:$0xf]
    %v597 = vld [vmem:[%s3 + $0x1c] sm:$0xf]
    %v598 = vld [vmem:[%s3 + $0x20] sm:$0xf]
    %v599 = vld [vmem:[%s3 + $0x24] sm:$0xf]
    %v600 = vld [vmem:[%s3 + $0x28] sm:$0xf]
    %v601 = vld [vmem:[%s3 + $0x2c] sm:$0xf]
    %v602 = vld [vmem:[%s3 + $0x30] sm:$0xf]
    %v603 = vld [vmem:[%s3 + $0x34] sm:$0xf]
    %v604 = vld [vmem:[%s3 + $0x38] sm:$0xf]
    %v605 = vld [vmem:[%s3 + $0x3c] sm:$0xf]
    %v606 = vld [vmem:[%s3 + $0x40] sm:$0xf]
    %v607 = vld [vmem:[%s3 + $0x44] sm:$0xf]
    %v608 = vld [vmem:[%s3 + $0x48] sm:$0xf]
    %v609 = vld [vmem:[%s3 + $0x4c] sm:$0xf]
    %v610 = vld [vmem:[%s3 + $0x50] sm:$0xf]
    %v611 = vld [vmem:[%s3 + $0x54] sm:$0xf]
    %v612 = vld [vmem:[%s3 + $0x58] sm:$0xf]
    %v613 = vld [vmem:[%s3 + $0x5c] sm:$0xf]
    %v614 = vld [vmem:[%s3 + $0x60] sm:$0xf]
    %v615 = vld [vmem:[%s3 + $0x64] sm:$0xf]
    %v616 = vld [vmem:[%s3 + $0x68] sm:$0xf]
    %v617 = vld [vmem:[%s3 + $0x6c] sm:$0xf]
    %v618 = vld [vmem:[%s3 + $0x70] sm:$0xf]
    %v619 = vld [vmem:[%s3 + $0x74] sm:$0xf]
    %v620 = vld [vmem:[%s3 + $0x78] sm:$0xf]
    %v621 = vld [vmem:[%s3 + $0x7c] sm:$0xf]
    %v622 = vld [vmem:[%s4] sm:$0x1]
    %v623 = vpack.c.bf16 %v588, %v586
    %v624 = vpack.c.bf16 %v589, %v587
    %v626 = vperm.slane %v622, 0
    %v660 = vunpack.c.l.b16 %v590
    %v661 = vunpack.c.l.b16 %v591
    %v662 = vunpack.c.l.b16 %v592
    %v663 = vunpack.c.l.b16 %v593
    %v664 = vunpack.c.l.b16 %v594
    %v665 = vunpack.c.l.b16 %v595
    %v666 = vunpack.c.l.b16 %v596
    %v667 = vunpack.c.l.b16 %v597
    %v668 = vunpack.c.l.b16 %v598
    %v669 = vunpack.c.l.b16 %v599
    %v670 = vunpack.c.l.b16 %v600
    %v671 = vunpack.c.l.b16 %v601
    %v672 = vunpack.c.l.b16 %v602
    %v673 = vunpack.c.l.b16 %v603
    %v674 = vunpack.c.l.b16 %v604
    %v675 = vunpack.c.l.b16 %v605
    %v676 = vunpack.c.l.b16 %v606
    %v677 = vunpack.c.l.b16 %v607
    %v678 = vunpack.c.l.b16 %v608
    %v679 = vunpack.c.l.b16 %v609
    %v680 = vunpack.c.l.b16 %v610
    %v681 = vunpack.c.l.b16 %v611
    %v682 = vunpack.c.l.b16 %v612
    %v683 = vunpack.c.l.b16 %v613
    %v684 = vunpack.c.l.b16 %v614
    %v685 = vunpack.c.l.b16 %v615
    %v686 = vunpack.c.l.b16 %v616
    %v687 = vunpack.c.l.b16 %v617
    %v688 = vunpack.c.l.b16 %v618
    %v689 = vunpack.c.l.b16 %v619
    %v690 = vunpack.c.l.b16 %v620
    %v691 = vunpack.c.l.b16 %v621
    %v692 = vpack.c.b16 %v661, %v660
    %v693 = vpack.c.b16 %v663, %v662
    %v694 = vpack.c.b16 %v665, %v664
    %v695 = vpack.c.b16 %v667, %v666
    %v696 = vpack.c.b16 %v669, %v668
    %v697 = vpack.c.b16 %v671, %v670
    %v698 = vpack.c.b16 %v673, %v672
    %v699 = vpack.c.b16 %v675, %v674
    %v700 = vpack.c.b16 %v677, %v676
    %v701 = vpack.c.b16 %v679, %v678
    %v702 = vpack.c.b16 %v681, %v680
    %v703 = vpack.c.b16 %v683, %v682
    %v704 = vpack.c.b16 %v685, %v684
    %v705 = vpack.c.b16 %v687, %v686
    %v706 = vpack.c.b16 %v689, %v688
    %v707 = vpack.c.b16 %v691, %v690
    %724 = vmatpush.bf16.msra.mxu0 %v699
    %725 = vmatpush.bf16.msra.mxu0 %v698
    %726 = vmatpush.bf16.msra.mxu0 %v697
    %727 = vmatpush.bf16.msra.mxu0 %v696
    %728 = vmatpush.bf16.msra.mxu0 %v695
    %729 = vmatpush.bf16.msra.mxu0 %v694
    %730 = vmatpush.bf16.msra.mxu0 %v693
    %731 = vmatpush.bf16.msra.mxu0 %v692
    %732 = vmatmul.bf16.gmra.mxu0 %v623
    %v733 = vpop.f32.mrf.mxu0
    %v734 = vadd.f32 %v626, %v733
    %v735 = vpop.f32.mrf.mxu0
    %v736 = vadd.f32 %v626, %v735
    %737 = vdwg.mxu0
    %738 = vmatpush.bf16.msra.mxu0 %v707
    %739 = vmatpush.bf16.msra.mxu0 %v706
    %740 = vmatpush.bf16.msra.mxu0 %v705
    %741 = vmatpush.bf16.msra.mxu0 %v704
    %742 = vmatpush.bf16.msra.mxu0 %v703
    %743 = vmatpush.bf16.msra.mxu0 %v702
    %744 = vmatpush.bf16.msra.mxu0 %v701
    %745 = vmatpush.bf16.msra.mxu0 %v700
    %746 = vmatmul.bf16.gmra.mxu0 %v624
    %v747 = vpop.f32.mrf.mxu0
    %v748 = vadd.f32 %v734, %v747
    %v749 = vpop.f32.mrf.mxu0
    %v750 = vadd.f32 %v736, %v749
    %751 = vdwg.mxu0
    %v752 = vmax.f32 %v748, 0.0
    %v753 = vmax.f32 %v750, 0.0
    %v754 = vld [vmem:[%s5] sm:$0xf]
    %v755 = vld [vmem:[%s5 + $0x4] sm:$0xf]
    %v756 = vld [vmem:[%s5 + $0x8] sm:$0xf]
    %v757 = vld [vmem:[%s5 + $0xc] sm:$0xf]
    %v758 = vld [vmem:[%s5 + $0x10] sm:$0xf]
    %v759 = vld [vmem:[%s5 + $0x14] sm:$0xf]
    %v760 = vld [vmem:[%s5 + $0x18] sm:$0xf]
    %v761 = vld [vmem:[%s5 + $0x1c] sm:$0xf]
    %v762 = vld [vmem:[%s6] sm:$0x1]
    %v763 = vpack.c.bf16 %v753, %v752
    %v765 = vperm.slane %v762, 0
    %v775 = vunpack.c.l.b16 %v754
    %v776 = vunpack.c.l.b16 %v755
    %v777 = vunpack.c.l.b16 %v756
    %v778 = vunpack.c.l.b16 %v757
    %v779 = vunpack.c.l.b16 %v758
    %v780 = vunpack.c.l.b16 %v759
    %v781 = vunpack.c.l.b16 %v760
    %v782 = vunpack.c.l.b16 %v761
    %v783 = vpack.c.b16 %v776, %v775
    %v784 = vpack.c.b16 %v778, %v777
    %v785 = vpack.c.b16 %v780, %v779
    %v786 = vpack.c.b16 %v782, %v781
    %vm791 = vcmask 523264
    %v793 = vsel %vm791, %v763, 0
    %795 = vmatpush.bf16.msra.mxu0 0
    %796 = vmatpush.bf16.msra.mxu0 0
    %797 = vmatpush.bf16.msra.mxu0 0
    %798 = vmatpush.bf16.msra.mxu0 0
    %799 = vmatpush.bf16.msra.mxu0 %v786
    %800 = vmatpush.bf16.msra.mxu0 %v785
    %801 = vmatpush.bf16.msra.mxu0 %v784
    %802 = vmatpush.bf16.msra.mxu0 %v783
    %803 = vmatmul.bf16.gmra.mxu0 %v793
    %v804 = vpop.f32.mrf.mxu0
    %v805 = vadd.f32 %v765, %v804
    %v806 = vpop.f32.mrf.mxu0
    %v807 = vadd.f32 %v765, %v806
    %808 = vdwg.mxu0
    %v809 = vmax.f32 %v805, 0.0
    %v810 = vmax.f32 %v807, 0.0
    %v811 = vld [vmem:[%s7] sm:$0xff]
    %v812 = vld [vmem:[%s7 + $0x8] sm:$0xff]
    %v813 = vld [vmem:[%s7 + $0x10] sm:$0xff]
    %v814 = vld [vmem:[%s7 + $0x18] sm:$0xff]
    %v815 = vld [vmem:[%s7 + $0x20] sm:$0xff]
    %v816 = vld [vmem:[%s7 + $0x28] sm:$0xff]
    %v817 = vld [vmem:[%s7 + $0x30] sm:$0xff]
    %v818 = vld [vmem:[%s7 + $0x38] sm:$0xff]
    %v819 = vld [vmem:[%s8] sm:$0x3]
    %v820 = vpack.c.bf16 %v810, %v809
    %v822 = vperm.slane %v819, 0
    %v823 = vperm.slane %v819, 1
    %v834 = vunpack.c.l.b16 %v811
    %v835 = vunpack.c.h.b16 %v811
    %v836 = vunpack.c.l.b16 %v812
    %v837 = vunpack.c.h.b16 %v812
    %v838 = vunpack.c.l.b16 %v813
    %v839 = vunpack.c.h.b16 %v813
    %v840 = vunpack.c.l.b16 %v814
    %v841 = vunpack.c.h.b16 %v814
    %v842 = vunpack.c.l.b16 %v815
    %v843 = vunpack.c.h.b16 %v815
    %v844 = vunpack.c.l.b16 %v816
    %v845 = vunpack.c.h.b16 %v816
    %v846 = vunpack.c.l.b16 %v817
    %v847 = vunpack.c.h.b16 %v817
    %v848 = vunpack.c.l.b16 %v818
    %v849 = vunpack.c.h.b16 %v818
    %v850 = vpack.c.b16 %v836, %v834
    %v851 = vpack.c.b16 %v837, %v835
    %v852 = vpack.c.b16 %v840, %v838
    %v853 = vpack.c.b16 %v841, %v839
    %v854 = vpack.c.b16 %v844, %v842
    %v855 = vpack.c.b16 %v845, %v843
    %v856 = vpack.c.b16 %v848, %v846
    %v857 = vpack.c.b16 %v849, %v847
    %v867 = vsel %vm791, %v820, 0
    %869 = vmatpush.bf16.msra.mxu0 0
    %870 = vmatpush.bf16.msra.mxu0 0
    %871 = vmatpush.bf16.msra.mxu0 0
    %872 = vmatpush.bf16.msra.mxu0 0
    %873 = vmatpush.bf16.msra.mxu0 %v856
    %874 = vmatpush.bf16.msra.mxu0 %v854
    %875 = vmatpush.bf16.msra.mxu0 %v852
    %876 = vmatpush.bf16.msra.mxu0 %v850
    %877 = vmatmul.bf16.gmra.mxu0 %v867
    %v878 = vpop.f32.mrf.mxu0
    %v879 = vadd.f32 %v822, %v878
    %v880 = vpop.f32.mrf.mxu0
    %v881 = vadd.f32 %v822, %v880
    %882 = vdwg.mxu0
    %883 = vmatpush.bf16.msra.mxu0 0
    %884 = vmatpush.bf16.msra.mxu0 0
    %885 = vmatpush.bf16.msra.mxu0 0
    %886 = vmatpush.bf16.msra.mxu0 0
    %887 = vmatpush.bf16.msra.mxu0 %v857
    %888 = vmatpush.bf16.msra.mxu0 %v855
    %889 = vmatpush.bf16.msra.mxu0 %v853
    %890 = vmatpush.bf16.msra.mxu0 %v851
    %891 = vmatmul.bf16.gmra.mxu0 %v867
    %v892 = vpop.f32.mrf.mxu0
    %v893 = vadd.f32 %v823, %v892
    %v894 = vpop.f32.mrf.mxu0
    %v895 = vadd.f32 %v823, %v894
    %896 = vdwg.mxu0
    %v897 = vmax.f32 %v879, 0.0
    %v898 = vmax.f32 %v893, 0.0
    %v899 = vmax.f32 %v881, 0.0
    %v900 = vmax.f32 %v895, 0.0
    %v901 = vld [vmem:[#allocation5] sm:$0xff]
    %v902 = vld [vmem:[#allocation5 + $0x8] sm:$0xff]
    %v903 = vld [vmem:[#allocation5 + $0x10] sm:$0xff]
    %v904 = vld [vmem:[#allocation5 + $0x18] sm:$0xff]
    %v905 = vld [vmem:[#allocation5 + $0x20] sm:$0xff]
    %v906 = vld [vmem:[#allocation5 + $0x28] sm:$0xff]
    %v907 = vld [vmem:[#allocation5 + $0x30] sm:$0xff]
    %v908 = vld [vmem:[#allocation5 + $0x38] sm:$0xff]
    %v909 = vld [vmem:[#allocation5 + $0x40] sm:$0xff]
    %v910 = vld [vmem:[#allocation5 + $0x48] sm:$0xff]
    %v911 = vld [vmem:[#allocation5 + $0x50] sm:$0xff]
    %v912 = vld [vmem:[#allocation5 + $0x58] sm:$0xff]
    %v913 = vld [vmem:[#allocation5 + $0x60] sm:$0xff]
    %v914 = vld [vmem:[#allocation5 + $0x68] sm:$0xff]
    %v915 = vld [vmem:[#allocation5 + $0x70] sm:$0xff]
    %v916 = vld [vmem:[#allocation5 + $0x78] sm:$0xff]
    %v917 = vld [vmem:[#allocation5 + $0x80] sm:$0xff]
    %v918 = vld [vmem:[#allocation5 + $0x88] sm:$0xff]
    %v919 = vld [vmem:[#allocation5 + $0x90] sm:$0xff]
    %v920 = vld [vmem:[#allocation5 + $0x98] sm:$0xff]
    %v921 = vld [vmem:[#allocation5 + $0xa0] sm:$0xff]
    %v922 = vld [vmem:[#allocation5 + $0xa8] sm:$0xff]
    %v923 = vld [vmem:[#allocation5 + $0xb0] sm:$0xff]
    %v924 = vld [vmem:[#allocation5 + $0xb8] sm:$0xff]
    %v925 = vld [vmem:[#allocation5 + $0xc0] sm:$0xff]
    %v926 = vld [vmem:[#allocation5 + $0xc8] sm:$0xff]
    %v927 = vld [vmem:[#allocation5 + $0xd0] sm:$0xff]
    %v928 = vld [vmem:[#allocation5 + $0xd8] sm:$0xff]
    %v929 = vld [vmem:[#allocation5 + $0xe0] sm:$0xff]
    %v930 = vld [vmem:[#allocation5 + $0xe8] sm:$0xff]
    %v931 = vld [vmem:[#allocation5 + $0xf0] sm:$0xff]
    %v932 = vld [vmem:[#allocation5 + $0xf8] sm:$0xff]
    %v933 = vld [vmem:[#allocation5 + $0x100] sm:$0xff]
    %v934 = vld [vmem:[#allocation5 + $0x108] sm:$0xff]
    %v935 = vld [vmem:[#allocation5 + $0x110] sm:$0xff]
    %v936 = vld [vmem:[#allocation5 + $0x118] sm:$0xff]
    %v937 = vld [vmem:[#allocation5 + $0x120] sm:$0xff]
    %v938 = vld [vmem:[#allocation5 + $0x128] sm:$0xff]
    %v939 = vld [vmem:[#allocation5 + $0x130] sm:$0xff]
    %v940 = vld [vmem:[#allocation5 + $0x138] sm:$0xff]
    %v941 = vld [vmem:[#allocation5 + $0x140] sm:$0xff]
    %v942 = vld [vmem:[#allocation5 + $0x148] sm:$0xff]
    %v943 = vld [vmem:[#allocation5 + $0x150] sm:$0xff]
    %v944 = vld [vmem:[#allocation5 + $0x158] sm:$0xff]
    %v945 = vld [vmem:[#allocation5 + $0x160] sm:$0xff]
    %v946 = vld [vmem:[#allocation5 + $0x168] sm:$0xff]
    %v947 = vld [vmem:[#allocation5 + $0x170] sm:$0xff]
    %v948 = vld [vmem:[#allocation5 + $0x178] sm:$0xff]
    %v949 = vld [vmem:[#allocation5 + $0x180] sm:$0xff]
    %v950 = vld [vmem:[#allocation5 + $0x188] sm:$0xff]
    %v951 = vld [vmem:[#allocation5 + $0x190] sm:$0xff]
    %v952 = vld [vmem:[#allocation5 + $0x198] sm:$0xff]
    %v953 = vld [vmem:[#allocation5 + $0x1a0] sm:$0xff]
    %v954 = vld [vmem:[#allocation5 + $0x1a8] sm:$0xff]
    %v955 = vld [vmem:[#allocation5 + $0x1b0] sm:$0xff]
    %v956 = vld [vmem:[#allocation5 + $0x1b8] sm:$0xff]
    %v957 = vld [vmem:[#allocation5 + $0x1c0] sm:$0xff]
    %v958 = vld [vmem:[#allocation5 + $0x1c8] sm:$0xff]
    %v959 = vld [vmem:[#allocation5 + $0x1d0] sm:$0xff]
    %v960 = vld [vmem:[#allocation5 + $0x1d8] sm:$0xff]
    %v961 = vld [vmem:[#allocation5 + $0x1e0] sm:$0xff]
    %v962 = vld [vmem:[#allocation5 + $0x1e8] sm:$0xff]
    %v963 = vld [vmem:[#allocation5 + $0x1f0] sm:$0xff]
    %v964 = vld [vmem:[#allocation5 + $0x1f8] sm:$0xff]
    %v965 = vld [vmem:[%s10] sm:$0xf]
    %v966 = vpack.c.bf16 %v899, %v897
    %v967 = vpack.c.bf16 %v900, %v898
    %v969 = vperm.slane %v965, 0
    %v970 = vperm.slane %v965, 1
    %v971 = vperm.slane %v965, 2
    %v972 = vperm.slane %v965, 3
    %v1041 = vunpack.c.l.b16 %v901
    %v1042 = vunpack.c.h.b16 %v901
    %v1043 = vunpack.c.l.b16 %v902
    %v1044 = vunpack.c.h.b16 %v902
    %v1045 = vunpack.c.l.b16 %v903
    %v1046 = vunpack.c.h.b16 %v903
    %v1047 = vunpack.c.l.b16 %v904
    %v1048 = vunpack.c.h.b16 %v904
    %v1049 = vunpack.c.l.b16 %v905
    %v1050 = vunpack.c.h.b16 %v905
    %v1051 = vunpack.c.l.b16 %v906
    %v1052 = vunpack.c.h.b16 %v906
    %v1053 = vunpack.c.l.b16 %v907
    %v1054 = vunpack.c.h.b16 %v907
    %v1055 = vunpack.c.l.b16 %v908
    %v1056 = vunpack.c.h.b16 %v908
    %v1057 = vunpack.c.l.b16 %v909
    %v1058 = vunpack.c.h.b16 %v909
    %v1059 = vunpack.c.l.b16 %v910
    %v1060 = vunpack.c.h.b16 %v910
    %v1061 = vunpack.c.l.b16 %v911
    %v1062 = vunpack.c.h.b16 %v911
    %v1063 = vunpack.c.l.b16 %v912
    %v1064 = vunpack.c.h.b16 %v912
    %v1065 = vunpack.c.l.b16 %v913
    %v1066 = vunpack.c.h.b16 %v913
    %v1067 = vunpack.c.l.b16 %v914
    %v1068 = vunpack.c.h.b16 %v914
    %v1069 = vunpack.c.l.b16 %v915
    %v1070 = vunpack.c.h.b16 %v915
    %v1071 = vunpack.c.l.b16 %v916
    %v1072 = vunpack.c.h.b16 %v916
    %v1073 = vunpack.c.l.b16 %v917
    %v1074 = vunpack.c.h.b16 %v917
    %v1075 = vunpack.c.l.b16 %v918
    %v1076 = vunpack.c.h.b16 %v918
    %v1077 = vunpack.c.l.b16 %v919
    %v1078 = vunpack.c.h.b16 %v919
    %v1079 = vunpack.c.l.b16 %v920
    %v1080 = vunpack.c.h.b16 %v920
    %v1081 = vunpack.c.l.b16 %v921
    %v1082 = vunpack.c.h.b16 %v921
    %v1083 = vunpack.c.l.b16 %v922
    %v1084 = vunpack.c.h.b16 %v922
    %v1085 = vunpack.c.l.b16 %v923
    %v1086 = vunpack.c.h.b16 %v923
    %v1087 = vunpack.c.l.b16 %v924
    %v1088 = vunpack.c.h.b16 %v924
    %v1089 = vunpack.c.l.b16 %v925
    %v1090 = vunpack.c.h.b16 %v925
    %v1091 = vunpack.c.l.b16 %v926
    %v1092 = vunpack.c.h.b16 %v926
    %v1093 = vunpack.c.l.b16 %v927
    %v1094 = vunpack.c.h.b16 %v927
    %v1095 = vunpack.c.l.b16 %v928
    %v1096 = vunpack.c.h.b16 %v928
    %v1097 = vunpack.c.l.b16 %v929
    %v1098 = vunpack.c.h.b16 %v929
    %v1099 = vunpack.c.l.b16 %v930
    %v1100 = vunpack.c.h.b16 %v930
    %v1101 = vunpack.c.l.b16 %v931
    %v1102 = vunpack.c.h.b16 %v931
    %v1103 = vunpack.c.l.b16 %v932
    %v1104 = vunpack.c.h.b16 %v932
    %v1105 = vunpack.c.l.b16 %v933
    %v1106 = vunpack.c.h.b16 %v933
    %v1107 = vunpack.c.l.b16 %v934
    %v1108 = vunpack.c.h.b16 %v934
    %v1109 = vunpack.c.l.b16 %v935
    %v1110 = vunpack.c.h.b16 %v935
    %v1111 = vunpack.c.l.b16 %v936
    %v1112 = vunpack.c.h.b16 %v936
    %v1113 = vunpack.c.l.b16 %v937
    %v1114 = vunpack.c.h.b16 %v937
    %v1115 = vunpack.c.l.b16 %v938
    %v1116 = vunpack.c.h.b16 %v938
    %v1117 = vunpack.c.l.b16 %v939
    %v1118 = vunpack.c.h.b16 %v939
    %v1119 = vunpack.c.l.b16 %v940
    %v1120 = vunpack.c.h.b16 %v940
    %v1121 = vunpack.c.l.b16 %v941
    %v1122 = vunpack.c.h.b16 %v941
    %v1123 = vunpack.c.l.b16 %v942
    %v1124 = vunpack.c.h.b16 %v942
    %v1125 = vunpack.c.l.b16 %v943
    %v1126 = vunpack.c.h.b16 %v943
    %v1127 = vunpack.c.l.b16 %v944
    %v1128 = vunpack.c.h.b16 %v944
    %v1129 = vunpack.c.l.b16 %v945
    %v1130 = vunpack.c.h.b16 %v945
    %v1131 = vunpack.c.l.b16 %v946
    %v1132 = vunpack.c.h.b16 %v946
    %v1133 = vunpack.c.l.b16 %v947
    %v1134 = vunpack.c.h.b16 %v947
    %v1135 = vunpack.c.l.b16 %v948
    %v1136 = vunpack.c.h.b16 %v948
    %v1137 = vunpack.c.l.b16 %v949
    %v1138 = vunpack.c.h.b16 %v949
    %v1139 = vunpack.c.l.b16 %v950
    %v1140 = vunpack.c.h.b16 %v950
    %v1141 = vunpack.c.l.b16 %v951
    %v1142 = vunpack.c.h.b16 %v951
    %v1143 = vunpack.c.l.b16 %v952
    %v1144 = vunpack.c.h.b16 %v952
    %v1145 = vunpack.c.l.b16 %v953
    %v1146 = vunpack.c.h.b16 %v953
    %v1147 = vunpack.c.l.b16 %v954
    %v1148 = vunpack.c.h.b16 %v954
    %v1149 = vunpack.c.l.b16 %v955
    %v1150 = vunpack.c.h.b16 %v955
    %v1151 = vunpack.c.l.b16 %v956
    %v1152 = vunpack.c.h.b16 %v956
    %v1153 = vunpack.c.l.b16 %v957
    %v1154 = vunpack.c.h.b16 %v957
    %v1155 = vunpack.c.l.b16 %v958
    %v1156 = vunpack.c.h.b16 %v958
    %v1157 = vunpack.c.l.b16 %v959
    %v1158 = vunpack.c.h.b16 %v959
    %v1159 = vunpack.c.l.b16 %v960
    %v1160 = vunpack.c.h.b16 %v960
    %v1161 = vunpack.c.l.b16 %v961
    %v1162 = vunpack.c.h.b16 %v961
    %v1163 = vunpack.c.l.b16 %v962
    %v1164 = vunpack.c.h.b16 %v962
    %v1165 = vunpack.c.l.b16 %v963
    %v1166 = vunpack.c.h.b16 %v963
    %v1167 = vunpack.c.l.b16 %v964
    %v1168 = vunpack.c.h.b16 %v964
    %v1169 = vpack.c.b16 %v1045, %v1041
    %v1170 = vpack.c.b16 %v1046, %v1042
    %v1171 = vpack.c.b16 %v1047, %v1043
    %v1172 = vpack.c.b16 %v1048, %v1044
    %v1173 = vpack.c.b16 %v1053, %v1049
    %v1174 = vpack.c.b16 %v1054, %v1050
    %v1175 = vpack.c.b16 %v1055, %v1051
    %v1176 = vpack.c.b16 %v1056, %v1052
    %v1177 = vpack.c.b16 %v1061, %v1057
    %v1178 = vpack.c.b16 %v1062, %v1058
    %v1179 = vpack.c.b16 %v1063, %v1059
    %v1180 = vpack.c.b16 %v1064, %v1060
    %v1181 = vpack.c.b16 %v1069, %v1065
    %v1182 = vpack.c.b16 %v1070, %v1066
    %v1183 = vpack.c.b16 %v1071, %v1067
    %v1184 = vpack.c.b16 %v1072, %v1068
    %v1185 = vpack.c.b16 %v1077, %v1073
    %v1186 = vpack.c.b16 %v1078, %v1074
    %v1187 = vpack.c.b16 %v1079, %v1075
    %v1188 = vpack.c.b16 %v1080, %v1076
    %v1189 = vpack.c.b16 %v1085, %v1081
    %v1190 = vpack.c.b16 %v1086, %v1082
    %v1191 = vpack.c.b16 %v1087, %v1083
    %v1192 = vpack.c.b16 %v1088, %v1084
    %v1193 = vpack.c.b16 %v1093, %v1089
    %v1194 = vpack.c.b16 %v1094, %v1090
    %v1195 = vpack.c.b16 %v1095, %v1091
    %v1196 = vpack.c.b16 %v1096, %v1092
    %v1197 = vpack.c.b16 %v1101, %v1097
    %v1198 = vpack.c.b16 %v1102, %v1098
    %v1199 = vpack.c.b16 %v1103, %v1099
    %v1200 = vpack.c.b16 %v1104, %v1100
    %v1201 = vpack.c.b16 %v1109, %v1105
    %v1202 = vpack.c.b16 %v1110, %v1106
    %v1203 = vpack.c.b16 %v1111, %v1107
    %v1204 = vpack.c.b16 %v1112, %v1108
    %v1205 = vpack.c.b16 %v1117, %v1113
    %v1206 = vpack.c.b16 %v1118, %v1114
    %v1207 = vpack.c.b16 %v1119, %v1115
    %v1208 = vpack.c.b16 %v1120, %v1116
    %v1209 = vpack.c.b16 %v1125, %v1121
    %v1210 = vpack.c.b16 %v1126, %v1122
    %v1211 = vpack.c.b16 %v1127, %v1123
    %v1212 = vpack.c.b16 %v1128, %v1124
    %v1213 = vpack.c.b16 %v1133, %v1129
    %v1214 = vpack.c.b16 %v1134, %v1130
    %v1215 = vpack.c.b16 %v1135, %v1131
    %v1216 = vpack.c.b16 %v1136, %v1132
    %v1217 = vpack.c.b16 %v1141, %v1137
    %v1218 = vpack.c.b16 %v1142, %v1138
    %v1219 = vpack.c.b16 %v1143, %v1139
    %v1220 = vpack.c.b16 %v1144, %v1140
    %v1221 = vpack.c.b16 %v1149, %v1145
    %v1222 = vpack.c.b16 %v1150, %v1146
    %v1223 = vpack.c.b16 %v1151, %v1147
    %v1224 = vpack.c.b16 %v1152, %v1148
    %v1225 = vpack.c.b16 %v1157, %v1153
    %v1226 = vpack.c.b16 %v1158, %v1154
    %v1227 = vpack.c.b16 %v1159, %v1155
    %v1228 = vpack.c.b16 %v1160, %v1156
    %v1229 = vpack.c.b16 %v1165, %v1161
    %v1230 = vpack.c.b16 %v1166, %v1162
    %v1231 = vpack.c.b16 %v1167, %v1163
    %v1232 = vpack.c.b16 %v1168, %v1164
    %1297 = vmatpush.bf16.msra.mxu0 %v1197
    %1298 = vmatpush.bf16.msra.mxu0 %v1193
    %1299 = vmatpush.bf16.msra.mxu0 %v1189
    %1300 = vmatpush.bf16.msra.mxu0 %v1185
    %1301 = vmatpush.bf16.msra.mxu0 %v1181
    %1302 = vmatpush.bf16.msra.mxu0 %v1177
    %1303 = vmatpush.bf16.msra.mxu0 %v1173
    %1304 = vmatpush.bf16.msra.mxu0 %v1169
    %1305 = vmatmul.bf16.gmra.mxu0 %v966
    %v1306 = vpop.f32.mrf.mxu0
    %v1307 = vadd.f32 %v969, %v1306
    %v1308 = vpop.f32.mrf.mxu0
    %v1309 = vadd.f32 %v969, %v1308
    %1310 = vdwg.mxu0
    %1311 = vmatpush.bf16.msra.mxu0 %v1229
    %1312 = vmatpush.bf16.msra.mxu0 %v1225
    %1313 = vmatpush.bf16.msra.mxu0 %v1221
    %1314 = vmatpush.bf16.msra.mxu0 %v1217
    %1315 = vmatpush.bf16.msra.mxu0 %v1213
    %1316 = vmatpush.bf16.msra.mxu0 %v1209
    %1317 = vmatpush.bf16.msra.mxu0 %v1205
    %1318 = vmatpush.bf16.msra.mxu0 %v1201
    %1319 = vmatmul.bf16.gmra.mxu0 %v967
    %v1320 = vpop.f32.mrf.mxu0
    %v1321 = vadd.f32 %v1307, %v1320
    %v1322 = vpop.f32.mrf.mxu0
    %v1323 = vadd.f32 %v1309, %v1322
    %1324 = vdwg.mxu0
    %1325 = vmatpush.bf16.msra.mxu0 %v1198
    %1326 = vmatpush.bf16.msra.mxu0 %v1194
    %1327 = vmatpush.bf16.msra.mxu0 %v1190
    %1328 = vmatpush.bf16.msra.mxu0 %v1186
    %1329 = vmatpush.bf16.msra.mxu0 %v1182
    %1330 = vmatpush.bf16.msra.mxu0 %v1178
    %1331 = vmatpush.bf16.msra.mxu0 %v1174
    %1332 = vmatpush.bf16.msra.mxu0 %v1170
    %1333 = vmatmul.bf16.gmra.mxu0 %v966
    %v1334 = vpop.f32.mrf.mxu0
    %v1335 = vadd.f32 %v970, %v1334
    %v1336 = vpop.f32.mrf.mxu0
    %v1337 = vadd.f32 %v970, %v1336
    %1338 = vdwg.mxu0
    %1339 = vmatpush.bf16.msra.mxu0 %v1230
    %1340 = vmatpush.bf16.msra.mxu0 %v1226
    %1341 = vmatpush.bf16.msra.mxu0 %v1222
    %1342 = vmatpush.bf16.msra.mxu0 %v1218
    %1343 = vmatpush.bf16.msra.mxu0 %v1214
    %1344 = vmatpush.bf16.msra.mxu0 %v1210
    %1345 = vmatpush.bf16.msra.mxu0 %v1206
    %1346 = vmatpush.bf16.msra.mxu0 %v1202
    %1347 = vmatmul.bf16.gmra.mxu0 %v967
    %v1348 = vpop.f32.mrf.mxu0
    %v1349 = vadd.f32 %v1335, %v1348
    %v1350 = vpop.f32.mrf.mxu0
    %v1351 = vadd.f32 %v1337, %v1350
    %1352 = vdwg.mxu0
    %1353 = vmatpush.bf16.msra.mxu0 %v1199
    %1354 = vmatpush.bf16.msra.mxu0 %v1195
    %1355 = vmatpush.bf16.msra.mxu0 %v1191
    %1356 = vmatpush.bf16.msra.mxu0 %v1187
    %1357 = vmatpush.bf16.msra.mxu0 %v1183
    %1358 = vmatpush.bf16.msra.mxu0 %v1179
    %1359 = vmatpush.bf16.msra.mxu0 %v1175
    %1360 = vmatpush.bf16.msra.mxu0 %v1171
    %1361 = vmatmul.bf16.gmra.mxu0 %v966
    %v1362 = vpop.f32.mrf.mxu0
    %v1363 = vadd.f32 %v971, %v1362
    %v1364 = vpop.f32.mrf.mxu0
    %v1365 = vadd.f32 %v971, %v1364
    %1366 = vdwg.mxu0
    %1367 = vmatpush.bf16.msra.mxu0 %v1231
    %1368 = vmatpush.bf16.msra.mxu0 %v1227
    %1369 = vmatpush.bf16.msra.mxu0 %v1223
    %1370 = vmatpush.bf16.msra.mxu0 %v1219
    %1371 = vmatpush.bf16.msra.mxu0 %v1215
    %1372 = vmatpush.bf16.msra.mxu0 %v1211
    %1373 = vmatpush.bf16.msra.mxu0 %v1207
    %1374 = vmatpush.bf16.msra.mxu0 %v1203
    %1375 = vmatmul.bf16.gmra.mxu0 %v967
    %v1376 = vpop.f32.mrf.mxu0
    %v1377 = vadd.f32 %v1363, %v1376
    %v1378 = vpop.f32.mrf.mxu0
    %v1379 = vadd.f32 %v1365, %v1378
    %1380 = vdwg.mxu0
    %1381 = vmatpush.bf16.msra.mxu0 %v1200
    %1382 = vmatpush.bf16.msra.mxu0 %v1196
    %1383 = vmatpush.bf16.msra.mxu0 %v1192
    %1384 = vmatpush.bf16.msra.mxu0 %v1188
    %1385 = vmatpush.bf16.msra.mxu0 %v1184
    %1386 = vmatpush.bf16.msra.mxu0 %v1180
    %1387 = vmatpush.bf16.msra.mxu0 %v1176
    %1388 = vmatpush.bf16.msra.mxu0 %v1172
    %1389 = vmatmul.bf16.gmra.mxu0 %v966
    %v1390 = vpop.f32.mrf.mxu0
    %v1391 = vadd.f32 %v972, %v1390
    %v1392 = vpop.f32.mrf.mxu0
    %v1393 = vadd.f32 %v972, %v1392
    %1394 = vdwg.mxu0
    %1395 = vmatpush.bf16.msra.mxu0 %v1232
    %1396 = vmatpush.bf16.msra.mxu0 %v1228
    %1397 = vmatpush.bf16.msra.mxu0 %v1224
    %1398 = vmatpush.bf16.msra.mxu0 %v1220
    %1399 = vmatpush.bf16.msra.mxu0 %v1216
    %1400 = vmatpush.bf16.msra.mxu0 %v1212
    %1401 = vmatpush.bf16.msra.mxu0 %v1208
    %1402 = vmatpush.bf16.msra.mxu0 %v1204
    %1403 = vmatmul.bf16.gmra.mxu0 %v967
    %v1404 = vpop.f32.mrf.mxu0
    %v1405 = vadd.f32 %v1391, %v1404
    %v1406 = vpop.f32.mrf.mxu0
    %v1407 = vadd.f32 %v1393, %v1406
    %1408 = vdwg.mxu0
    %1409 = vst [vmem:[#allocation7] sm:$0xff] %v1321
    %1410 = vst [vmem:[#allocation7 + $0x8] sm:$0xff] %v1349
    %1411 = vst [vmem:[#allocation7 + $0x10] sm:$0xff] %v1377
    %1412 = vst [vmem:[#allocation7 + $0x18] sm:$0xff] %v1405
    %1413 = vst [vmem:[#allocation7 + $0x20] sm:$0xff] %v1323
    %1414 = vst [vmem:[#allocation7 + $0x28] sm:$0xff] %v1351
    %1415 = vst [vmem:[#allocation7 + $0x30] sm:$0xff] %v1379
    %1416 = vst [vmem:[#allocation7 + $0x38] sm:$0xff] %v1407
    // Predicated region
    $region54: #{autoencoder_forward.1} parent=1 // pred_check
      _
    $region55: #{autoencoder_forward.1} parent=1 // pred_check_branch
      %1418 = sbr.rel (0) target = $region57
    $region56: #{autoencoder_forward.1} parent=1 // pred_region
      %1420 = vsyncadd [#allocation4], 0
      %s1421 = sshll.u32 [#allocation7], 4
      %s1422 = int_to_ptr.vmem [resolvable:$true] %s1421
      %s1423 = sshll.u32 %s11, 4
      %s1424 = int_to_ptr.hbm [resolvable:$true] %s1423
      %1429 = dma.vmem_to_hbm [thread:$0]  %s1422, 1024, %s1424, [#allocation4], 512, 512, 32
    $region57: #{autoencoder_forward.1} parent=1 // pred_fallthru
      _
    // Predicated region
    $region58: #{autoencoder_forward.1} parent=1 // pred_check
      _
    $region59: #{autoencoder_forward.1} parent=1 // pred_check_branch
      %1431 = sbr.rel (0) target = $region61
    $region60: #{autoencoder_forward.1} parent=1 // pred_region
      %1433 = dma.done [#allocation4], 1024
    $region61: #{autoencoder_forward.1} parent=1 // pred_fallthru
      _
    %1434 = vsyncpa [#allocation3], 1
    %1435 = vsyncpa [#allocation6], 1
    %1436 = vsyncpa [#allocation4], 1

</llo_original>
